<compile_context>
chip_gen: v7x
topology: tpu7x:2x2x1
jax: 0.10.0
libtpu: 0.0.40
codegen_flags: <defaults>
</compile_context>

<pallas_src>
import jax
import jax.numpy as jnp
from jax.experimental import pallas as pl
from jax.experimental.pallas import tpu as pltpu

_LANE = 128
_SUBLANE = 8


def _round_up(v, m):
    return ((v + m - 1) // m) * m


def _classification_head_kernel(x_ref, w1t_ref, b1_ref, w2t_ref, b2_ref, o_ref):
    # x_ref:   (TILE_B, H)     -- streamed per grid step (double-buffered)
    # w1t_ref: (H, H)          -- dense weight, pre-transposed, single-buffered
    # b1_ref:  (1, H)
    # w2t_ref: (H, L_pad)      -- out_proj weight, pre-transposed + lane-padded
    # b2_ref:  (1, L_pad)
    # o_ref:   (TILE_B, L_pad)

    # Enforce matched MXU operand dtypes: bf16 weights -> bf16 activations
    # (avoids silent promotion of bf16 weights to the slow f32 MXU path).
    x = x_ref[...].astype(w1t_ref.dtype)

    # dense: x @ W1^T on the MXU, f32 accumulation.
    h = jnp.dot(x, w1t_ref[...], preferred_element_type=jnp.float32)
    h = h + b1_ref[...].astype(jnp.float32)

    # tanh on the f32 accumulator (EUP slot, effectively free vs MXU work).
    h = jnp.tanh(h)

    # out_proj: recast activations to the weight dtype, accumulate in f32.
    h = h.astype(w2t_ref.dtype)
    out = jnp.dot(h, w2t_ref[...], preferred_element_type=jnp.float32)
    out = out + b2_ref[...].astype(jnp.float32)

    o_ref[...] = out.astype(o_ref.dtype)


def prepare_params(w1, b1, w2, b2, param_dtype=None):
    """One-time parameter preparation (call at init, not per forward pass).

    w1: [H, H]  PyTorch Linear layout [out_features, in_features]
    b1: [H]
    w2: [L, H]
    b2: [L]
    param_dtype: optionally cast weights (e.g. jnp.bfloat16) for the MXU.

    Returns (w1t, b1_2d, w2t_pad, b2_2d_pad, num_labels).
    L is padded to exactly the next multiple of 128 lanes (no further).
    """
    H = w1.shape[0]
    L = w2.shape[0]
    L_pad = _round_up(L, _LANE)

    if param_dtype is not None:
        w1 = w1.astype(param_dtype)
        w2 = w2.astype(param_dtype)

    w1t = jnp.transpose(w1)                                               # (H, H)
    w2t_pad = jnp.zeros((H, L_pad), dtype=w2.dtype).at[:, :L].set(jnp.transpose(w2))
    b1_2d = b1.reshape(1, H)
    b2_2d_pad = jnp.zeros((1, L_pad), dtype=b2.dtype).at[:, :L].set(b2)
    return w1t, b1_2d, w2t_pad, b2_2d_pad, L


def roberta_classification_head(x, w1t, b1_2d, w2t_pad, b2_2d_pad, num_labels,
                                *, tile_b=None,
                                vmem_budget_bytes=24 * 1024 * 1024):
    """Forward pass. x: [B, H] (pooled CLS features). Returns [B, num_labels]."""
    B, H = x.shape
    L_pad = w2t_pad.shape[1]

    x_isz = jnp.dtype(x.dtype).itemsize
    w_isz = jnp.dtype(w1t.dtype).itemsize
    b_isz = jnp.dtype(b1_2d.dtype).itemsize

    # ---- VMEM footprint model (drives tile_b and vmem_limit_bytes) ----
    # Weights/biases: single-buffered (pl.Buffered(1), constant index_map).
    weight_bytes = (H * H + H * L_pad) * w_isz + (H + L_pad) * b_isz
    # Per batch row: x tile (x2 bufs) + out tile (x2 bufs) + f32 h + recast h.
    per_row_bytes = (2 * H * x_isz
                     + 2 * L_pad * x_isz
                     + H * 4
                     + H * w_isz)
    avail = max(vmem_budget_bytes - weight_bytes - (1 << 20), per_row_bytes * _SUBLANE)
    max_tile_b = max(_SUBLANE, (avail // per_row_bytes // _SUBLANE) * _SUBLANE)

    if tile_b is None:
        # bf16 operands: big tiles (amortize ~0.35us/step, v6e roofline);
        # f32 operands: 256 rows keeps v5e inside its scoped-VMEM budget.
        tile_b = 1024 if (w_isz <= 2 and x_isz <= 2) else 256
    tile_b = min(tile_b, max_tile_b)

    if B < 2 * _SUBLANE:
        # Too small to split: one full-batch block.
        tile_b = B
    else:
        # Guarantee >= 2 grid steps so the "parallel" batch axis can be
        # sharded across both TensorCores on v7x (no-op on 1-TC v5e/v6e).
        tile_b = min(tile_b, max(_SUBLANE, _round_up(pl.cdiv(B, 2), _SUBLANE)))
        tile_b = max(_SUBLANE, (tile_b // _SUBLANE) * _SUBLANE)

    grid = (pl.cdiv(B, tile_b),)

    # Explicit scoped-VMEM limit sized from the actual footprint (+ slack),
    # instead of relying on per-generation defaults.
    footprint = weight_bytes + tile_b * per_row_bytes
    vmem_limit = int(min(max(footprint + (4 << 20), 16 << 20), 64 << 20))

    cost = pl.CostEstimate(
        flops=int(2 * B * H * H + 2 * B * H * L_pad),
        transcendentals=int(B * H),
        bytes_accessed=int(x.size * x_isz
                           + (H * H + H * L_pad) * w_isz
                           + B * L_pad * x_isz),
    )

    resident = pl.Buffered(1)  # constant blocks: no double-buffering needed

    out_padded = pl.pallas_call(
        _classification_head_kernel,
        out_shape=jax.ShapeDtypeStruct((B, L_pad), x.dtype),
        grid=grid,
        in_specs=[
            pl.BlockSpec((tile_b, H), lambda i: (i, 0)),                       # x
            pl.BlockSpec((H, H), lambda i: (0, 0), pipeline_mode=resident),    # W1t
            pl.BlockSpec((1, H), lambda i: (0, 0), pipeline_mode=resident),    # b1
            pl.BlockSpec((H, L_pad), lambda i: (0, 0), pipeline_mode=resident),  # W2t
            pl.BlockSpec((1, L_pad), lambda i: (0, 0), pipeline_mode=resident),  # b2
        ],
        out_specs=pl.BlockSpec((tile_b, L_pad), lambda i: (i, 0)),
        compiler_params=pltpu.CompilerParams(
            dimension_semantics=("parallel",),   # megacore split on v7x
            vmem_limit_bytes=vmem_limit),
        cost_estimate=cost,
    )(x, w1t, b1_2d, w2t_pad, b2_2d_pad)

    # Slice the lane-padded output back to the real label count (cheap XLA op).
    return out_padded[:, :num_labels]


def _reference(x, w1, b1, w2, b2):
    h = jnp.tanh(x @ w1.T + b1)
    return h @ w2.T + b2


if __name__ == "__main__":
    # Small config consistent with the module: hidden_size=32, num_labels=4.
    batch = 8
    hidden = 32
    num_labels = 4

    key = jax.random.PRNGKey(0)
    k_x, k_w1, k_b1, k_w2, k_b2 = jax.random.split(key, 5)

    x = jax.random.normal(k_x, (batch, hidden), dtype=jnp.float32)
    # PyTorch Linear layout: [out_features, in_features].
    w1 = jax.random.normal(k_w1, (hidden, hidden), dtype=jnp.float32) * 0.05
    b1 = jax.random.normal(k_b1, (hidden,), dtype=jnp.float32) * 0.05
    w2 = jax.random.normal(k_w2, (num_labels, hidden), dtype=jnp.float32) * 0.05
    b2 = jax.random.normal(k_b2, (num_labels,), dtype=jnp.float32) * 0.05

    # One-time weight prep (transpose + lane padding), hoisted off the hot path.
    w1t, b1_2d, w2t_pad, b2_2d_pad, L = prepare_params(w1, b1, w2, b2)
    ref = _reference(x, w1, b1, w2, b2)

    # --- f32 path, small batch (single block) ---
    out = roberta_classification_head(x, w1t, b1_2d, w2t_pad, b2_2d_pad, L)
    out = jax.block_until_ready(out)
    assert out.shape == (batch, num_labels)
    assert jnp.allclose(out, ref, atol=1e-5, rtol=1e-5), "mismatch vs reference (f32)"

    # --- f32 path, larger batch exercising the batch grid (>= 2 steps) ---
    big_batch = 1024
    xb = jax.random.normal(k_x, (big_batch, hidden), dtype=jnp.float32)
    out_b = roberta_classification_head(xb, w1t, b1_2d, w2t_pad, b2_2d_pad, L)
    out_b = jax.block_until_ready(out_b)
    ref_b = _reference(xb, w1, b1, w2, b2)
    assert out_b.shape == (big_batch, num_labels)
    assert jnp.allclose(out_b, ref_b, atol=1e-5, rtol=1e-5), "mismatch vs reference (grid)"

    # --- bf16 weights + bf16 activations straight to the MXU (f32 accumulation) ---
    w1t_bf, b1_bf, w2t_bf, b2_bf, _ = prepare_params(w1, b1, w2, b2,
                                                     param_dtype=jnp.bfloat16)
    out_bf = roberta_classification_head(x.astype(jnp.bfloat16),
                                         w1t_bf, b1_bf, w2t_bf, b2_bf, L)
    out_bf = jax.block_until_ready(out_bf)
    assert out_bf.shape == (batch, num_labels)
    assert jnp.allclose(out_bf.astype(jnp.float32), ref, atol=5e-2, rtol=5e-2), \
        "mismatch vs reference (bf16)"

    # --- f32 activations with bf16 weights: kernel enforces bf16 MXU operands ---
    out_mix = roberta_classification_head(x, w1t_bf, b1_bf, w2t_bf, b2_bf, L)
    out_mix = jax.block_until_ready(out_mix)
    assert jnp.allclose(out_mix, ref, atol=5e-2, rtol=5e-2), \
        "mismatch vs reference (mixed f32 x / bf16 weights)"

    print("KERNEL_OK")
</pallas_src>

<mosaic_0001>
module attributes {stable_mosaic.version = 11 : i64} {
  func.func @_classification_head_kernel(%arg0: i32, %arg1: memref<8x32xf32, #tpu.memory_space<vmem>>, %arg2: memref<32x32xf32, #tpu.memory_space<vmem>>, %arg3: memref<1x32xf32, #tpu.memory_space<vmem>>, %arg4: memref<32x128xf32, #tpu.memory_space<vmem>>, %arg5: memref<1x128xf32, #tpu.memory_space<vmem>>, %arg6: memref<8x128xf32, #tpu.memory_space<vmem>>) attributes {dimension_semantics = [#tpu.dimension_semantics<parallel>], iteration_bounds = array<i64: 1>, scalar_prefetch = 0 : i64, scratch_operands = 0 : i64, tpu.core_type = #tpu.core_type<tc>, window_params = [{transform_indices = @transform_0, window_bounds = array<i64: 8, 32>}, {pipeline_mode = #tpu.pipeline_mode<synchronous>, transform_indices = @transform_1, window_bounds = array<i64: 32, 32>}, {pipeline_mode = #tpu.pipeline_mode<synchronous>, transform_indices = @transform_2, window_bounds = array<i64: 1, 32>}, {pipeline_mode = #tpu.pipeline_mode<synchronous>, transform_indices = @transform_3, window_bounds = array<i64: 32, 128>}, {pipeline_mode = #tpu.pipeline_mode<synchronous>, transform_indices = @transform_4, window_bounds = array<i64: 1, 128>}, {transform_indices = @transform_5, window_bounds = array<i64: 8, 128>}]} {
    %c0 = arith.constant 0 : index
    %c0_0 = arith.constant 0 : index
    %0 = vector.load %arg1[%c0, %c0_0] : memref<8x32xf32, #tpu.memory_space<vmem>>, vector<8x32xf32>
    %c0_1 = arith.constant 0 : index
    %c0_2 = arith.constant 0 : index
    %1 = vector.load %arg2[%c0_1, %c0_2] : memref<32x32xf32, #tpu.memory_space<vmem>>, vector<32x32xf32>
    %cst = arith.constant dense<0.000000e+00> : vector<8x32xf32>
    %2 = tpu.matmul %0, %1, %cst {dimension_numbers = #tpu.dot_dimension_numbers<[1], [0], [0], [1], [0, 0, 1, 1], [], []>} : vector<8x32xf32>, vector<32x32xf32>, vector<8x32xf32> -> vector<8x32xf32>
    %c0_3 = arith.constant 0 : index
    %c0_4 = arith.constant 0 : index
    %3 = vector.load %arg3[%c0_3, %c0_4] : memref<1x32xf32, #tpu.memory_space<vmem>>, vector<1x32xf32>
    %4 = vector.broadcast %3 : vector<1x32xf32> to vector<8x32xf32>
    %5 = arith.addf %2, %4 : vector<8x32xf32>
    %6 = math.tanh %5 : vector<8x32xf32>
    %c0_5 = arith.constant 0 : index
    %c0_6 = arith.constant 0 : index
    %7 = vector.load %arg4[%c0_5, %c0_6] : memref<32x128xf32, #tpu.memory_space<vmem>>, vector<32x128xf32>
    %cst_7 = arith.constant dense<0.000000e+00> : vector<8x128xf32>
    %8 = tpu.matmul %6, %7, %cst_7 {dimension_numbers = #tpu.dot_dimension_numbers<[1], [0], [0], [1], [0, 0, 1, 1], [], []>} : vector<8x32xf32>, vector<32x128xf32>, vector<8x128xf32> -> vector<8x128xf32>
    %c0_8 = arith.constant 0 : index
    %c0_9 = arith.constant 0 : index
    %9 = vector.load %arg5[%c0_8, %c0_9] : memref<1x128xf32, #tpu.memory_space<vmem>>, vector<1x128xf32>
    %10 = vector.broadcast %9 : vector<1x128xf32> to vector<8x128xf32>
    %11 = arith.addf %8, %10 : vector<8x128xf32>
    %c0_10 = arith.constant 0 : index
    %c0_11 = arith.constant 0 : index
    %12 = vector.load %arg6[%c0_10, %c0_11] : memref<8x128xf32, #tpu.memory_space<vmem>>, vector<8x128xf32>
    tpu.vector_store %arg6[%c0_10, %c0_11], %11 {strides = array<i32>} : memref<8x128xf32, #tpu.memory_space<vmem>>, vector<8x128xf32>,
    return
  }
  func.func @transform_0(%arg0: i32) -> (i32, i32) {
    %c0_i32 = arith.constant 0 : i32
    %c0_i32_0 = arith.constant 0 : i32
    return %arg0, %c0_i32 : i32, i32
  }
  func.func @transform_1(%arg0: i32) -> (i32, i32) {
    %c0_i32 = arith.constant 0 : i32
    %c0_i32_0 = arith.constant 0 : i32
    %c0_i32_1 = arith.constant 0 : i32
    return %c0_i32, %c0_i32_0 : i32, i32
  }
  func.func @transform_2(%arg0: i32) -> (i32, i32) {
    %c0_i32 = arith.constant 0 : i32
    %c0_i32_0 = arith.constant 0 : i32
    %c0_i32_1 = arith.constant 0 : i32
    return %c0_i32, %c0_i32_0 : i32, i32
  }
  func.func @transform_3(%arg0: i32) -> (i32, i32) {
    %c0_i32 = arith.constant 0 : i32
    %c0_i32_0 = arith.constant 0 : i32
    %c0_i32_1 = arith.constant 0 : i32
    return %c0_i32, %c0_i32_0 : i32, i32
  }
  func.func @transform_4(%arg0: i32) -> (i32, i32) {
    %c0_i32 = arith.constant 0 : i32
    %c0_i32_0 = arith.constant 0 : i32
    %c0_i32_1 = arith.constant 0 : i32
    return %c0_i32, %c0_i32_0 : i32, i32
  }
  func.func @transform_5(%arg0: i32) -> (i32, i32) {
    %c0_i32 = arith.constant 0 : i32
    %c0_i32_0 = arith.constant 0 : i32
    return %arg0, %c0_i32 : i32, i32
  }
}

</mosaic_0001>

<llo_original>
// kernel: tpu_custom_call.1
$region0: #{tpu_custom_call.1}
  #allocation0 [shape = 'u32[]', space=smem, size = 0x4, offset = 0x4, fixed_abs, tag = 'smem constant byte address 0x4 - core index']
  #allocation1 [shape = 'u32[144,128]{1,0:T(1,128)}', space=vmem, size = 0x12000, scoped, tag = 'internal scratch']
  %s0 = inlined_call_operand.hbm [shape: f32[8,32], index: 0, kind: input, shape index: {}]
  %s1 = inlined_call_operand.hbm [shape: f32[32,32], index: 1, kind: input, shape index: {}]
  %s2 = inlined_call_operand.vmem [shape: f32[1,32], index: 2, kind: input, shape index: {}]
  %s3 = inlined_call_operand.hbm [shape: f32[32,128], index: 3, kind: input, shape index: {}]
  %s4 = inlined_call_operand.vmem [shape: f32[1,128], index: 4, kind: input, shape index: {}]
  %s5 = inlined_call_operand.hbm [shape: f32[8,128], index: 5, kind: output, shape index: {}]
  %s6 = sld [smem:[#allocation0]]
  $region42: #{tpu_custom_call.1} parent=0
    _
  %s8 = ssub.s32 1, %s6
  %s9 = scalar_select 0, %s8, %s6
  $region1: #{tpu_custom_call.1} parent=0
    #allocation2 [shape = 'u8[4096]{0}', space=vmem, size = 0x1000, scoped, tag = 'input window, operand 0, single buffered']
    #allocation3 [shape = 's32[1]{0}', space=sflag, size = 0x4, scoped, tag = 'scoped memory for tpu_custom_call.1']
    #allocation4 [shape = 's32[1]{0}', space=sflag, size = 0x4, scoped, tag = 'scoped memory for tpu_custom_call.1']
    #allocation5 [shape = 'u8[16384]{0}', space=vmem, size = 0x4000, scoped, tag = 'input window, operand 1, single buffered']
    #allocation6 [shape = 's32[1]{0}', space=sflag, size = 0x4, scoped, tag = 'scoped memory for tpu_custom_call.1']
    #allocation7 [shape = 'u8[16384]{0}', space=vmem, size = 0x4000, scoped, tag = 'input window, operand 3, single buffered']
    #allocation8 [shape = 'u8[4096]{0}', space=vmem, size = 0x1000, scoped, tag = 'output window, operand 0, single buffered']
    %10 = vsyncpa [#allocation3], 0
    %11 = vsyncpa [#allocation6], 0
    %12 = vsyncpa [#allocation4], 0
    // Predicated region
    $region2: #{tpu_custom_call.1} parent=1 // pred_check
      _
    $region3: #{tpu_custom_call.1} parent=1 // pred_check_branch
      %14 = sbr.rel (0) target = $region5
    $region4: #{tpu_custom_call.1} parent=1 // pred_region
      %s16 = ssub.s32 128, 128
      %17 = vsyncadd [#allocation3], %s16
      %s19 = sshll.u32 [#allocation2], 4
      %s20 = int_to_ptr.vmem [resolvable:$true] %s19
      %22 = dma.hbm_to_vmem [thread:$0]  %s0, 128, %s20, [#allocation3]
    $region5: #{tpu_custom_call.1} parent=1 // pred_fallthru
      _
    // Predicated region
    $region6: #{tpu_custom_call.1} parent=1 // pred_check
      _
    $region7: #{tpu_custom_call.1} parent=1 // pred_check_branch
      %24 = sbr.rel (0) target = $region9
    $region8: #{tpu_custom_call.1} parent=1 // pred_region
      %s26 = ssub.s32 512, 512
      %27 = vsyncadd [#allocation6], %s26
      %s28 = sshll.u32 [#allocation5], 4
      %s29 = int_to_ptr.vmem [resolvable:$true] %s28
      %34 = dma.hbm_to_vmem [thread:$0]  %s1, 512, %s29, [#allocation6], 128, 128, 8
    $region9: #{tpu_custom_call.1} parent=1 // pred_fallthru
      _
    // Predicated region
    $region10: #{tpu_custom_call.1} parent=1 // pred_check
      _
    $region11: #{tpu_custom_call.1} parent=1 // pred_check_branch
      %36 = sbr.rel (0) target = $region13
    $region12: #{tpu_custom_call.1} parent=1 // pred_region
      _
    $region13: #{tpu_custom_call.1} parent=1 // pred_fallthru
      _
    // Predicated region
    $region14: #{tpu_custom_call.1} parent=1 // pred_check
      _
    $region15: #{tpu_custom_call.1} parent=1 // pred_check_branch
      %38 = sbr.rel (0) target = $region17
    $region16: #{tpu_custom_call.1} parent=1 // pred_region
      %s40 = ssub.s32 512, 512
      %41 = vsyncadd [#allocation6], %s40
      %s42 = sshll.u32 [#allocation7], 4
      %s43 = int_to_ptr.vmem [resolvable:$true] %s42
      %48 = dma.hbm_to_vmem [thread:$0]  %s3, 512, %s43, [#allocation6], 128, 128, 8
    $region17: #{tpu_custom_call.1} parent=1 // pred_fallthru
      _
    // Predicated region
    $region18: #{tpu_custom_call.1} parent=1 // pred_check
      _
    $region19: #{tpu_custom_call.1} parent=1 // pred_check_branch
      %50 = sbr.rel (0) target = $region21
    $region20: #{tpu_custom_call.1} parent=1 // pred_region
      _
    $region21: #{tpu_custom_call.1} parent=1 // pred_fallthru
      _
    // Predicated region
    $region22: #{tpu_custom_call.1} parent=1 // pred_check
      _
    $region23: #{tpu_custom_call.1} parent=1 // pred_check_branch
      %52 = sbr.rel (0) target = $region25
    $region24: #{tpu_custom_call.1} parent=1 // pred_region
      %53 = dma.done [#allocation3], 128
    $region25: #{tpu_custom_call.1} parent=1 // pred_fallthru
      _
    // Predicated region
    $region26: #{tpu_custom_call.1} parent=1 // pred_check
      _
    $region27: #{tpu_custom_call.1} parent=1 // pred_check_branch
      %55 = sbr.rel (0) target = $region29
    $region28: #{tpu_custom_call.1} parent=1 // pred_region
      %56 = dma.done [#allocation6], 512
    $region29: #{tpu_custom_call.1} parent=1 // pred_fallthru
      _
    // Predicated region
    $region30: #{tpu_custom_call.1} parent=1 // pred_check
      _
    $region31: #{tpu_custom_call.1} parent=1 // pred_check_branch
      %58 = sbr.rel (0) target = $region33
    $region32: #{tpu_custom_call.1} parent=1 // pred_region
      %59 = dma.done [#allocation6], 512
    $region33: #{tpu_custom_call.1} parent=1 // pred_fallthru
      _
    %v60 = vld [vmem:[#allocation2] sm:$0xff]
    %v61 = vld [vmem:[#allocation5] sm:$0xff]
    %v62 = vld [vmem:[#allocation5 + $0x8] sm:$0xff]
    %v63 = vld [vmem:[#allocation5 + $0x10] sm:$0xff]
    %v64 = vld [vmem:[#allocation5 + $0x18] sm:$0xff]
    %v65 = vld [vmem:[%s2] sm:$0x1]
    %v67 = vlaneseq
    %v68 = vshrl.u32 %v67, 7
    %v69 = vsub.s32 0, %v68
    %v70 = vrot.slane %v65, %v69
    %vm72 = vcmask 261120
    %v74 = vsel %vm72, %v60, 0
    %76 = vmatprep.subr.mxu0 0.0
    %77 = vmatpush1.msra.mxu0 %v61
    %78 = vmatprep.subr.mxu0 0.0
    %79 = vmatpush1.msra.mxu0 %v62
    %80 = vmatprep.subr.mxu0 0.0
    %81 = vmatpush1.msra.mxu0 %v63
    %82 = vmatprep.subr.mxu0 0.0
    %83 = vmatpush1.msra.mxu0 %v64
    %84 = vmatprep.subr.mxu0 0.0
    %85 = vmatpush1.msra.mxu0 0.0
    %86 = vmatprep.subr.mxu0 0.0
    %87 = vmatpush1.msra.mxu0 0.0
    %88 = vmatprep.subr.mxu0 0.0
    %89 = vmatpush1.msra.mxu0 0.0
    %90 = vmatprep.subr.mxu0 0.0
    %91 = vmatpush1.msra.mxu0 0.0
    %92 = vmatprep.subr.mxu0 0.0
    %93 = vmatpush1.msra.mxu0 0.0
    %94 = vmatprep.subr.mxu0 0.0
    %95 = vmatpush1.msra.mxu0 0.0
    %96 = vmatprep.subr.mxu0 0.0
    %97 = vmatpush1.msra.mxu0 0.0
    %98 = vmatprep.subr.mxu0 0.0
    %99 = vmatpush1.msra.mxu0 0.0
    %100 = vmatprep.subr.mxu0 0.0
    %101 = vmatpush1.msra.mxu0 0.0
    %102 = vmatprep.subr.mxu0 0.0
    %103 = vmatpush1.msra.mxu0 0.0
    %104 = vmatprep.subr.mxu0 0.0
    %105 = vmatpush1.msra.mxu0 0.0
    %106 = vmatprep.subr.mxu0 0.0
    %107 = vmatpush1.msra.mxu0 0.0
    %108 = vmatprep.subr.mxu0 0.0
    %109 = vmatpush1.msra.mxu0 0.0
    %110 = vmatprep.subr.mxu0 0.0
    %111 = vmatpush1.msra.mxu0 0.0
    %112 = vmatprep.subr.mxu0 0.0
    %113 = vmatpush1.msra.mxu0 0.0
    %114 = vmatprep.subr.mxu0 0.0
    %115 = vmatpush1.msra.mxu0 0.0
    %116 = vmatprep.subr.mxu0 0.0
    %117 = vmatpush1.msra.mxu0 0.0
    %118 = vmatprep.subr.mxu0 0.0
    %119 = vmatpush1.msra.mxu0 0.0
    %120 = vmatprep.subr.mxu0 0.0
    %121 = vmatpush1.msra.mxu0 0.0
    %122 = vmatprep.subr.mxu0 0.0
    %123 = vmatpush1.msra.mxu0 0.0
    %124 = vmatprep.subr.mxu0 0.0
    %125 = vmatpush1.msra.mxu0 0.0
    %126 = vmatprep.subr.mxu0 0.0
    %127 = vmatpush1.msra.mxu0 0.0
    %128 = vmatprep.subr.mxu0 0.0
    %129 = vmatpush1.msra.mxu0 0.0
    %130 = vmatprep.subr.mxu0 0.0
    %131 = vmatpush1.msra.mxu0 0.0
    %132 = vmatprep.subr.mxu0 0.0
    %133 = vmatpush1.msra.mxu0 0.0
    %134 = vmatprep.subr.mxu0 0.0
    %135 = vmatpush1.msra.mxu0 0.0
    %136 = vmatprep.subr.mxu0 0.0
    %137 = vmatpush1.msra.mxu0 0.0
    %138 = vmatprep.subr.mxu0 0.0
    %139 = vmatpush1.msra.mxu0 0.0
    %140 = vmatprep.mubr.f32.mxu0 0.0
    %141 = vmatmul.mubr.f32.gmra.mrb[0].mxu0 %v74
    %v142 = vpop.f32.mrb[0].mxu0
    %v143 = vadd.f32 %v70, %v142
    %v144 = vpop.f32.mrb[0].mxu0
    %145 = vdwg.mxu0
    %v146 = vtanh.pop %v143
    %v147 = vld [vmem:[#allocation7] sm:$0xff]
    %v148 = vld [vmem:[#allocation7 + $0x8] sm:$0xff]
    %v149 = vld [vmem:[#allocation7 + $0x10] sm:$0xff]
    %v150 = vld [vmem:[#allocation7 + $0x18] sm:$0xff]
    %v151 = vld [vmem:[%s4] sm:$0x1]
    %v153 = vlaneseq
    %v154 = vshrl.u32 %v153, 7
    %v155 = vsub.s32 0, %v154
    %v156 = vrot.slane %v151, %v155
    %v159 = vsel %vm72, %v146, 0
    %161 = vmatprep.subr.mxu0 0.0
    %162 = vmatpush1.msra.mxu0 %v147
    %163 = vmatprep.subr.mxu0 0.0
    %164 = vmatpush1.msra.mxu0 %v148
    %165 = vmatprep.subr.mxu0 0.0
    %166 = vmatpush1.msra.mxu0 %v149
    %167 = vmatprep.subr.mxu0 0.0
    %168 = vmatpush1.msra.mxu0 %v150
    %169 = vmatprep.subr.mxu0 0.0
    %170 = vmatpush1.msra.mxu0 0.0
    %171 = vmatprep.subr.mxu0 0.0
    %172 = vmatpush1.msra.mxu0 0.0
    %173 = vmatprep.subr.mxu0 0.0
    %174 = vmatpush1.msra.mxu0 0.0
    %175 = vmatprep.subr.mxu0 0.0
    %176 = vmatpush1.msra.mxu0 0.0
    %177 = vmatprep.subr.mxu0 0.0
    %178 = vmatpush1.msra.mxu0 0.0
    %179 = vmatprep.subr.mxu0 0.0
    %180 = vmatpush1.msra.mxu0 0.0
    %181 = vmatprep.subr.mxu0 0.0
    %182 = vmatpush1.msra.mxu0 0.0
    %183 = vmatprep.subr.mxu0 0.0
    %184 = vmatpush1.msra.mxu0 0.0
    %185 = vmatprep.subr.mxu0 0.0
    %186 = vmatpush1.msra.mxu0 0.0
    %187 = vmatprep.subr.mxu0 0.0
    %188 = vmatpush1.msra.mxu0 0.0
    %189 = vmatprep.subr.mxu0 0.0
    %190 = vmatpush1.msra.mxu0 0.0
    %191 = vmatprep.subr.mxu0 0.0
    %192 = vmatpush1.msra.mxu0 0.0
    %193 = vmatprep.subr.mxu0 0.0
    %194 = vmatpush1.msra.mxu0 0.0
    %195 = vmatprep.subr.mxu0 0.0
    %196 = vmatpush1.msra.mxu0 0.0
    %197 = vmatprep.subr.mxu0 0.0
    %198 = vmatpush1.msra.mxu0 0.0
    %199 = vmatprep.subr.mxu0 0.0
    %200 = vmatpush1.msra.mxu0 0.0
    %201 = vmatprep.subr.mxu0 0.0
    %202 = vmatpush1.msra.mxu0 0.0
    %203 = vmatprep.subr.mxu0 0.0
    %204 = vmatpush1.msra.mxu0 0.0
    %205 = vmatprep.subr.mxu0 0.0
    %206 = vmatpush1.msra.mxu0 0.0
    %207 = vmatprep.subr.mxu0 0.0
    %208 = vmatpush1.msra.mxu0 0.0
    %209 = vmatprep.subr.mxu0 0.0
    %210 = vmatpush1.msra.mxu0 0.0
    %211 = vmatprep.subr.mxu0 0.0
    %212 = vmatpush1.msra.mxu0 0.0
    %213 = vmatprep.subr.mxu0 0.0
    %214 = vmatpush1.msra.mxu0 0.0
    %215 = vmatprep.subr.mxu0 0.0
    %216 = vmatpush1.msra.mxu0 0.0
    %217 = vmatprep.subr.mxu0 0.0
    %218 = vmatpush1.msra.mxu0 0.0
    %219 = vmatprep.subr.mxu0 0.0
    %220 = vmatpush1.msra.mxu0 0.0
    %221 = vmatprep.subr.mxu0 0.0
    %222 = vmatpush1.msra.mxu0 0.0
    %223 = vmatprep.subr.mxu0 0.0
    %224 = vmatpush1.msra.mxu0 0.0
    %225 = vmatprep.mubr.f32.mxu0 0.0
    %226 = vmatmul.mubr.f32.gmra.mrb[0].mxu0 %v159
    %v227 = vpop.f32.mrb[0].mxu0
    %v228 = vadd.f32 %v156, %v227
    %v229 = vpop.f32.mrb[0].mxu0
    %230 = vdwg.mxu0
    %231 = vst [vmem:[#allocation8] sm:$0xff] %v228
    // Predicated region
    $region34: #{tpu_custom_call.1} parent=1 // pred_check
      _
    $region35: #{tpu_custom_call.1} parent=1 // pred_check_branch
      %233 = sbr.rel (0) target = $region37
    $region36: #{tpu_custom_call.1} parent=1 // pred_region
      %s235 = ssub.s32 128, 128
      %236 = vsyncadd [#allocation4], %s235
      %s238 = sshll.u32 [#allocation8], 4
      %s239 = int_to_ptr.vmem [resolvable:$true] %s238
      %241 = dma.vmem_to_hbm [thread:$0]  %s239, 128, %s5, [#allocation4]
    $region37: #{tpu_custom_call.1} parent=1 // pred_fallthru
      _
    // Predicated region
    $region38: #{tpu_custom_call.1} parent=1 // pred_check
      _
    $region39: #{tpu_custom_call.1} parent=1 // pred_check_branch
      %243 = sbr.rel (0) target = $region41
    $region40: #{tpu_custom_call.1} parent=1 // pred_region
      %244 = dma.done [#allocation4], 128
    $region41: #{tpu_custom_call.1} parent=1 // pred_fallthru
      _
    %245 = vsyncpa [#allocation3], 1
    %246 = vsyncpa [#allocation6], 1
    %247 = vsyncpa [#allocation4], 1

</llo_original>
